<compile_context>
chip_gen: v5e
topology: v5e:2x2
jax: 0.10.0
libtpu: 0.0.40
codegen_flags: <defaults>
</compile_context>

<pallas_src>
import functools
import math

import jax
import jax.numpy as jnp
from jax.experimental import pallas as pl
from jax.experimental.pallas import tpu as pltpu


def arcface_kernel(tile_flags_ref, labels_ref, logits_ref, out_ref, *,
                   s, s_cos_m, s_sin_m):
    i = pl.program_id(0)
    j = pl.program_id(1)
    x = logits_ref[...].astype(jnp.float32)            # (bn, bc), math in f32
    has_target = tile_flags_ref[i, j]                  # SMEM scalar

    @pl.when(has_target == 0)
    def _():
        # No row's label lands in this class tile: pure streaming scale.
        out_ref[...] = (x * s).astype(out_ref.dtype)

    @pl.when(has_target != 0)
    def _():
        bn, bc = x.shape
        # Shift labels into tile-local column coordinates and compare against a raw iota.
        # iota >= 0, so a -1 ("ignore") label or a label belonging to another tile
        # (shifted value < 0 or >= bc) can never match -> no explicit `!= -1` test.
        lbl_local = labels_ref[...] - j * bc            # (bn, 1) int32
        iota = jax.lax.broadcasted_iota(jnp.int32, (bn, bc), 1)
        is_target = iota == lbl_local
        sin_theta = jnp.sqrt(1.0 - x * x)               # EUP; NaN for |x|>1 matches torch
        target_val = x * s_cos_m - sin_theta * s_sin_m
        out_ref[...] = jnp.where(is_target, target_val, x * s).astype(out_ref.dtype)


def _pick_block(dim, preferred, align):
    """Largest legal block <= preferred: full extent if small, else aligned."""
    if dim <= preferred:
        return dim                                      # full-extent block is always legal
    return max((preferred // align) * align, align)


def arcface_forward(logits, labels, *, s=64.0, margin=0.5,
                    block_n=256, block_c=4096):
    n, c = logits.shape
    sublane = 16 if logits.dtype == jnp.bfloat16 else 8
    bn = _pick_block(n, block_n, sublane)               # sublane-aligned row tile
    bc = _pick_block(c, block_c, 128)                   # lane-dense class tile
    grid = (pl.cdiv(n, bn), pl.cdiv(c, bc))

    labels = labels.reshape(n).astype(jnp.int32)
    labels2d = labels.reshape(n, 1)

    # Per-(row-block, class-block) flag: does any row of this row block have its label in
    # this class tile?  O(n) JAX; prefetched to SMEM so unflagged tiles skip the mask/sqrt.
    row_blk = jnp.arange(n, dtype=jnp.int32) // bn
    col_blk = jnp.clip(labels // bc, 0, grid[1] - 1)
    hit = (labels >= 0).astype(jnp.int32)
    tile_flags = jnp.zeros(grid, jnp.int32).at[row_blk, col_blk].add(hit)
    tile_flags = (tile_flags > 0).astype(jnp.int32)

    kernel = functools.partial(
        arcface_kernel,
        s=float(s),
        s_cos_m=float(s) * math.cos(margin),
        s_sin_m=float(s) * math.sin(margin),
    )
    return pl.pallas_call(
        kernel,
        out_shape=jax.ShapeDtypeStruct((n, c), logits.dtype),
        grid_spec=pltpu.PrefetchScalarGridSpec(
            num_scalar_prefetch=1,
            grid=grid,
            in_specs=[
                pl.BlockSpec((bn, 1), lambda i, j, flags: (i, 0)),    # labels per row block
                pl.BlockSpec((bn, bc), lambda i, j, flags: (i, j)),   # logits tile
            ],
            out_specs=pl.BlockSpec((bn, bc), lambda i, j, flags: (i, j)),
        ),
        compiler_params=pltpu.CompilerParams(
            dimension_semantics=("parallel", "parallel"),
            vmem_limit_bytes=32 << 20,
        ),
    )(tile_flags, labels2d, logits)


def _reference(logits, labels, s=64.0, margin=0.5):
    x = logits.astype(jnp.float32)
    col = jnp.arange(x.shape[1], dtype=jnp.int32)[None, :]
    lbl = labels.astype(jnp.int32)[:, None]
    is_t = (col == lbl) & (lbl != -1)
    tgt = x * math.cos(margin) - jnp.sqrt(1.0 - x * x) * math.sin(margin)
    return jnp.where(is_t, tgt, x) * s


if __name__ == "__main__":
    key = jax.random.PRNGKey(0)
    k1, k2, k3, k4, k5 = jax.random.split(key, 5)

    # Test 1: single full-extent tile (grid (1, 1)), mixed valid and -1 labels.
    N, C = 16, 512
    logits = jax.random.uniform(k1, (N, C), jnp.float32, minval=-0.999, maxval=0.999)
    labels = jax.random.randint(k2, (N,), 0, C).astype(jnp.int32)
    labels = labels.at[jnp.array([1, 6, 11])].set(-1)
    out = jax.block_until_ready(arcface_forward(logits, labels))
    ref = _reference(logits, labels)
    assert jnp.allclose(out, ref, atol=1e-4, rtol=1e-4), float(jnp.max(jnp.abs(out - ref)))

    # Test 2: multi-tile grid (2 x 4) — exercises flagged AND unflagged tile paths plus
    # the tile-local label shift (labels concentrated in class tiles 0 and 3).
    N2, C2 = 64, 1024
    logits2 = jax.random.uniform(k3, (N2, C2), jnp.float32, minval=-0.999, maxval=0.999)
    lo = jax.random.randint(k4, (N2,), 0, 256)
    hi = jax.random.randint(k5, (N2,), 768, 1024)
    labels2 = jnp.where(jnp.arange(N2) % 2 == 0, lo, hi).astype(jnp.int32)
    labels2 = labels2.at[jnp.arange(0, N2, 7)].set(-1)
    out2 = jax.block_until_ready(
        arcface_forward(logits2, labels2, block_n=32, block_c=256))
    ref2 = _reference(logits2, labels2)
    assert jnp.allclose(out2, ref2, atol=1e-4, rtol=1e-4), float(jnp.max(jnp.abs(out2 - ref2)))

    # Test 3: bf16 I/O path (half the HBM bytes; math stays f32 inside the kernel).
    logits_bf = logits2.astype(jnp.bfloat16)
    out3 = jax.block_until_ready(
        arcface_forward(logits_bf, labels2, block_n=32, block_c=256))
    ref3 = _reference(logits_bf, labels2).astype(jnp.bfloat16)
    assert jnp.allclose(out3.astype(jnp.float32), ref3.astype(jnp.float32),
                        atol=1.0, rtol=2e-2)

    print("KERNEL_OK")
</pallas_src>

<mosaic_0001>
module attributes {stable_mosaic.version = 11 : i64} {
  func.func @arcface_kernel(%arg0: i32, %arg1: i32, %arg2: memref<1x1xi32, #tpu.memory_space<smem>>, %arg3: memref<16x1xi32, #tpu.memory_space<vmem>>, %arg4: memref<16x512xf32, #tpu.memory_space<vmem>>, %arg5: memref<16x512xf32, #tpu.memory_space<vmem>>) attributes {dimension_semantics = [#tpu.dimension_semantics<parallel>, #tpu.dimension_semantics<parallel>], iteration_bounds = array<i64: 1, 1>, scalar_prefetch = 1 : i64, scratch_operands = 0 : i64, tpu.core_type = #tpu.core_type<tc>, window_params = [{transform_indices = @transform_0, window_bounds = array<i64: 16, 1>}, {transform_indices = @transform_1, window_bounds = array<i64: 16, 512>}, {transform_indices = @transform_2, window_bounds = array<i64: 16, 512>}]} {
    %c0 = arith.constant 0 : index
    %c0_0 = arith.constant 0 : index
    %0 = vector.load %arg4[%c0, %c0_0] : memref<16x512xf32, #tpu.memory_space<vmem>>, vector<16x512xf32>
    %1 = arith.index_cast %arg0 : i32 to index
    %2 = arith.index_cast %arg1 : i32 to index
    %3 = memref.load %arg2[%1, %2] : memref<1x1xi32, #tpu.memory_space<smem>>
    %c0_i32 = arith.constant 0 : i32
    %4 = arith.cmpi eq, %3, %c0_i32 : i32
    %5 = arith.extui %4 : i1 to i32
    %c0_i32_1 = arith.constant 0 : i32
    %6 = arith.cmpi ne, %5, %c0_i32_1 : i32
    scf.if %6 {
      %cst = arith.constant 6.400000e+01 : f32
      %10 = vector.broadcast %cst : f32 to vector<16x512xf32>
      %11 = arith.mulf %0, %10 : vector<16x512xf32>
      %c0_4 = arith.constant 0 : index
      %c0_5 = arith.constant 0 : index
      %12 = vector.load %arg5[%c0_4, %c0_5] : memref<16x512xf32, #tpu.memory_space<vmem>>, vector<16x512xf32>
      tpu.vector_store %arg5[%c0_4, %c0_5], %11 {strides = array<i32>} : memref<16x512xf32, #tpu.memory_space<vmem>>, vector<16x512xf32>,
    } else {
    }
    %c0_i32_2 = arith.constant 0 : i32
    %7 = arith.cmpi ne, %3, %c0_i32_2 : i32
    %8 = arith.extui %7 : i1 to i32
    %c0_i32_3 = arith.constant 0 : i32
    %9 = arith.cmpi ne, %8, %c0_i32_3 : i32
    scf.if %9 {
      %c0_4 = arith.constant 0 : index
      %c0_5 = arith.constant 0 : index
      %10 = vector.load %arg3[%c0_4, %c0_5] : memref<16x1xi32, #tpu.memory_space<vmem>>, vector<16x1xi32>
      %c512_i32 = arith.constant 512 : i32
      %11 = arith.muli %arg1, %c512_i32 : i32
      %12 = vector.broadcast %11 : i32 to vector<16x1xi32>
      %13 = arith.subi %10, %12 : vector<16x1xi32>
      %14 = tpu.iota {dimensions = array<i32: 1>} : vector<16x512xi32>
      %15 = vector.broadcast %13 : vector<16x1xi32> to vector<16x512xi32>
      %16 = arith.cmpi eq, %14, %15 : vector<16x512xi32>
      %17 = arith.mulf %0, %0 : vector<16x512xf32>
      %cst = arith.constant 1.000000e+00 : f32
      %18 = vector.broadcast %cst : f32 to vector<16x512xf32>
      %19 = arith.subf %18, %17 : vector<16x512xf32>
      %20 = math.sqrt %19 : vector<16x512xf32>
      %cst_6 = arith.constant 56.1652832 : f32
      %21 = vector.broadcast %cst_6 : f32 to vector<16x512xf32>
      %22 = arith.mulf %0, %21 : vector<16x512xf32>
      %cst_7 = arith.constant 30.6832352 : f32
      %23 = vector.broadcast %cst_7 : f32 to vector<16x512xf32>
      %24 = arith.mulf %20, %23 : vector<16x512xf32>
      %25 = arith.subf %22, %24 : vector<16x512xf32>
      %cst_8 = arith.constant 6.400000e+01 : f32
      %26 = vector.broadcast %cst_8 : f32 to vector<16x512xf32>
      %27 = arith.mulf %0, %26 : vector<16x512xf32>
      %28 = arith.select %16, %25, %27 : vector<16x512xi1>, vector<16x512xf32>
      %c0_9 = arith.constant 0 : index
      %c0_10 = arith.constant 0 : index
      %29 = vector.load %arg5[%c0_9, %c0_10] : memref<16x512xf32, #tpu.memory_space<vmem>>, vector<16x512xf32>
      tpu.vector_store %arg5[%c0_9, %c0_10], %28 {strides = array<i32>} : memref<16x512xf32, #tpu.memory_space<vmem>>, vector<16x512xf32>,
    } else {
    }
    return
  }
  func.func @transform_0(%arg0: i32, %arg1: i32, %arg2: memref<1x1xi32, #tpu.memory_space<smem>>) -> (i32, i32) {
    %c0_i32 = arith.constant 0 : i32
    %c0_i32_0 = arith.constant 0 : i32
    return %arg0, %c0_i32 : i32, i32
  }
  func.func @transform_1(%arg0: i32, %arg1: i32, %arg2: memref<1x1xi32, #tpu.memory_space<smem>>) -> (i32, i32) {
    %c0_i32 = arith.constant 0 : i32
    return %arg0, %arg1 : i32, i32
  }
  func.func @transform_2(%arg0: i32, %arg1: i32, %arg2: memref<1x1xi32, #tpu.memory_space<smem>>) -> (i32, i32) {
    %c0_i32 = arith.constant 0 : i32
    return %arg0, %arg1 : i32, i32
  }
}

</mosaic_0001>

<llo_original>
// kernel: tpu_custom_call.1
$region0: #{tpu_custom_call.1}
  #allocation0 [shape = 'u32[]', space=smem, size = 0x4, offset = 0x4, fixed_abs, tag = 'smem constant byte address 0x4 - core index']
  #allocation1 [shape = 'u32[72,128]{1,0:T(1,128)}', space=vmem, size = 0x9000, scoped, tag = 'internal scratch']
  #allocation2 [shape = 's32[1]{0}', space=sflag, size = 0x4, scoped, tag = 'scoped memory for tpu_custom_call.1']
  #allocation3 [shape = 's32[1,1]{1,0:T(1,128)S(6)}', space=smem, size = 0x200, scoped, tag = 'prefetched SMEM operand 0']
  %s0 = inlined_call_operand.<no memory space> [shape: s32[1,1], index: 0, kind: input, shape index: {}]
  %s1 = inlined_call_operand.vmem [shape: s32[16,1], index: 1, kind: input, shape index: {}]
  %s2 = inlined_call_operand.hbm [shape: f32[16,512], index: 2, kind: input, shape index: {}]
  %s3 = inlined_call_operand.hbm [shape: f32[16,512], index: 3, kind: output, shape index: {}]
  %s4 = sld [smem:[#allocation0]]
  $region30: #{tpu_custom_call.1} parent=0
    _
  %s6 = ssub.s32 1, %s4
  %s7 = scalar_select 0, %s6, %s4
  %8 = sst [smem:[#allocation3]] %s0
  $region1: #{tpu_custom_call.1} parent=0
    #allocation4 [shape = 'u8[32768]{0}', space=vmem, size = 0x8000, scoped, tag = 'input window, operand 2, single buffered']
    #allocation5 [shape = 's32[1]{0}', space=sflag, size = 0x4, scoped, tag = 'scoped memory for tpu_custom_call.1']
    #allocation6 [shape = 's32[1]{0}', space=sflag, size = 0x4, scoped, tag = 'scoped memory for tpu_custom_call.1']
    #allocation7 [shape = 'u8[32768]{0}', space=vmem, size = 0x8000, scoped, tag = 'output window, operand 0, single buffered']
    %9 = vsyncpa [#allocation5], 0
    %10 = vsyncpa [#allocation6], 0
    // Predicated region
    $region2: #{tpu_custom_call.1} parent=1 // pred_check
      _
    $region3: #{tpu_custom_call.1} parent=1 // pred_check_branch
      %12 = sbr.rel (0) target = $region5
    $region4: #{tpu_custom_call.1} parent=1 // pred_region
      _
    $region5: #{tpu_custom_call.1} parent=1 // pred_fallthru
      _
    // Predicated region
    $region6: #{tpu_custom_call.1} parent=1 // pred_check
      _
    $region7: #{tpu_custom_call.1} parent=1 // pred_check_branch
      %14 = sbr.rel (0) target = $region9
    $region8: #{tpu_custom_call.1} parent=1 // pred_region
      %16 = vsyncadd [#allocation5], 0
      %s17 = sshll.u32 %s2, 4
      %s18 = int_to_ptr.hbm [resolvable:$true] %s17
      %s19 = sshll.u32 [#allocation4], 4
      %s20 = int_to_ptr.vmem [resolvable:$true] %s19
      %25 = dma.hbm_to_vmem [thread:$0]  %s18, 1024, %s20, [#allocation5], 512, 512, 32
    $region9: #{tpu_custom_call.1} parent=1 // pred_fallthru
      _
    // Predicated region
    $region10: #{tpu_custom_call.1} parent=1 // pred_check
      _
    $region11: #{tpu_custom_call.1} parent=1 // pred_check_branch
      %27 = sbr.rel (0) target = $region13
    $region12: #{tpu_custom_call.1} parent=1 // pred_region
      %29 = dma.done [#allocation5], 1024
    $region13: #{tpu_custom_call.1} parent=1 // pred_fallthru
      _
    %v30 = vld [vmem:[#allocation4] sm:$0xff]
    %v31 = vld [vmem:[#allocation4 + $0x8] sm:$0xff]
    %v32 = vld [vmem:[#allocation4 + $0x10] sm:$0xff]
    %v33 = vld [vmem:[#allocation4 + $0x18] sm:$0xff]
    %v34 = vld [vmem:[#allocation4 + $0x20] sm:$0xff]
    %v35 = vld [vmem:[#allocation4 + $0x28] sm:$0xff]
    %v36 = vld [vmem:[#allocation4 + $0x30] sm:$0xff]
    %v37 = vld [vmem:[#allocation4 + $0x38] sm:$0xff]
    %s38 = sadd.s32 0, 0
    %s39 = smul.u32 %s38, 128
    %s40 = sadd.s32 %s39, 0
    %s41 = sld [smem:[#allocation3 + %s40]]
    %p42 = scmp.eq.s32.totalorder %s41, 0
    // Predicated region
    $region14: #{tpu_custom_call.1} parent=1 // pred_check
      %p43 = pneg %p42
    $region15: #{tpu_custom_call.1} parent=1 // pred_check_branch
      %45 = sbr.rel (%p43) target = $region17
    $region16: #{tpu_custom_call.1} parent=1 // pred_region
      %v46 = vmul.f32 %v30, 64.0
      %v47 = vmul.f32 %v31, 64.0
      %v48 = vmul.f32 %v32, 64.0
      %v49 = vmul.f32 %v33, 64.0
      %v50 = vmul.f32 %v34, 64.0
      %v51 = vmul.f32 %v35, 64.0
      %v52 = vmul.f32 %v36, 64.0
      %v53 = vmul.f32 %v37, 64.0
      %54 = vst [vmem:[#allocation7] sm:$0xff] %v46
      %55 = vst [vmem:[#allocation7 + $0x8] sm:$0xff] %v47
      %56 = vst [vmem:[#allocation7 + $0x10] sm:$0xff] %v48
      %57 = vst [vmem:[#allocation7 + $0x18] sm:$0xff] %v49
      %58 = vst [vmem:[#allocation7 + $0x20] sm:$0xff] %v50
      %59 = vst [vmem:[#allocation7 + $0x28] sm:$0xff] %v51
      %60 = vst [vmem:[#allocation7 + $0x30] sm:$0xff] %v52
      %61 = vst [vmem:[#allocation7 + $0x38] sm:$0xff] %v53
    $region17: #{tpu_custom_call.1} parent=1 // pred_fallthru
      _
    %p62 = scmp.ne.s32.totalorder %s41, 0
    // Predicated region
    $region18: #{tpu_custom_call.1} parent=1 // pred_check
      %p63 = pneg %p62
    $region19: #{tpu_custom_call.1} parent=1 // pred_check_branch
      %65 = sbr.rel (%p63) target = $region21
    $region20: #{tpu_custom_call.1} parent=1 // pred_region
      %v66 = vld [vmem:[%s1] sm:$0xff]
      %v67 = vld [vmem:[%s1 + $0x8] sm:$0xff]
      %s68 = smul.u32 0, 512
      %v69 = vstv %s68
      %v70 = vsub.s32 %v66, %v69
      %v71 = vsub.s32 %v67, %v69
      %v72 = vlaneseq
      %v73 = vand.u32 %v72, 127
      %v74 = vadd.s32 %v73, 128
      %v75 = vadd.s32 %v73, 256
      %v76 = vadd.s32 %v73, 384
      %77 = vset.pattern.permute.xlu0 0
      %78 = vperm.xlu0 %77, %v70
      %v79 = vpop.permute.xlu0 %78
      %80 = vset.pattern.permute.xlu0 0
      %81 = vperm.xlu0 %80, %v71
      %v82 = vpop.permute.xlu0 %81
      %vm83 = vcmp.eq.s32.totalorder %v73, %v79
      %vm84 = vcmp.eq.s32.totalorder %v74, %v79
      %vm85 = vcmp.eq.s32.totalorder %v75, %v79
      %vm86 = vcmp.eq.s32.totalorder %v76, %v79
      %vm87 = vcmp.eq.s32.totalorder %v73, %v82
      %vm88 = vcmp.eq.s32.totalorder %v74, %v82
      %vm89 = vcmp.eq.s32.totalorder %v75, %v82
      %vm90 = vcmp.eq.s32.totalorder %v76, %v82
      %v91 = vmul.f32 %v30, %v30
      %v92 = vmul.f32 %v31, %v31
      %v93 = vmul.f32 %v32, %v32
      %v94 = vmul.f32 %v33, %v33
      %v95 = vmul.f32 %v34, %v34
      %v96 = vmul.f32 %v35, %v35
      %v97 = vmul.f32 %v36, %v36
      %v98 = vmul.f32 %v37, %v37
      %v99 = vsub.f32 1.0, %v91
      %v100 = vsub.f32 1.0, %v92
      %v101 = vsub.f32 1.0, %v93
      %v102 = vsub.f32 1.0, %v94
      %v103 = vsub.f32 1.0, %v95
      %v104 = vsub.f32 1.0, %v96
      %v105 = vsub.f32 1.0, %v97
      %v106 = vsub.f32 1.0, %v98
      %v107 = vrsqrt.pop %v99
      %v108 = vmul.f32 %v107, %v99
      %v109 = vmul.f32 %v108, %v107
      %v110 = vmul.f32 0.5, %v109
      %v111 = vsub.f32 1.5, %v110
      %v112 = vmul.f32 %v107, %v111
      %v113 = vmul.f32 %v99, %v112
      %vm114 = vcmp.eq.f32.partialorder %v99, inf
      %v115 = vsel %vm114, %v99, %v113
      %vm116 = vcmp.eq.f32.partialorder %v99, 0.0
      %v117 = vand.u32 %v99, 2147483648
      %v118 = vsel %vm116, %v117, %v115
      %v119 = vrsqrt.pop %v100
      %v120 = vmul.f32 %v119, %v100
      %v121 = vmul.f32 %v120, %v119
      %v122 = vmul.f32 0.5, %v121
      %v123 = vsub.f32 1.5, %v122
      %v124 = vmul.f32 %v119, %v123
      %v125 = vmul.f32 %v100, %v124
      %vm126 = vcmp.eq.f32.partialorder %v100, inf
      %v127 = vsel %vm126, %v100, %v125
      %vm128 = vcmp.eq.f32.partialorder %v100, 0.0
      %v129 = vand.u32 %v100, 2147483648
      %v130 = vsel %vm128, %v129, %v127
      %v131 = vrsqrt.pop %v101
      %v132 = vmul.f32 %v131, %v101
      %v133 = vmul.f32 %v132, %v131
      %v134 = vmul.f32 0.5, %v133
      %v135 = vsub.f32 1.5, %v134
      %v136 = vmul.f32 %v131, %v135
      %v137 = vmul.f32 %v101, %v136
      %vm138 = vcmp.eq.f32.partialorder %v101, inf
      %v139 = vsel %vm138, %v101, %v137
      %vm140 = vcmp.eq.f32.partialorder %v101, 0.0
      %v141 = vand.u32 %v101, 2147483648
      %v142 = vsel %vm140, %v141, %v139
      %v143 = vrsqrt.pop %v102
      %v144 = vmul.f32 %v143, %v102
      %v145 = vmul.f32 %v144, %v143
      %v146 = vmul.f32 0.5, %v145
      %v147 = vsub.f32 1.5, %v146
      %v148 = vmul.f32 %v143, %v147
      %v149 = vmul.f32 %v102, %v148
      %vm150 = vcmp.eq.f32.partialorder %v102, inf
      %v151 = vsel %vm150, %v102, %v149
      %vm152 = vcmp.eq.f32.partialorder %v102, 0.0
      %v153 = vand.u32 %v102, 2147483648
      %v154 = vsel %vm152, %v153, %v151
      %v155 = vrsqrt.pop %v103
      %v156 = vmul.f32 %v155, %v103
      %v157 = vmul.f32 %v156, %v155
      %v158 = vmul.f32 0.5, %v157
      %v159 = vsub.f32 1.5, %v158
      %v160 = vmul.f32 %v155, %v159
      %v161 = vmul.f32 %v103, %v160
      %vm162 = vcmp.eq.f32.partialorder %v103, inf
      %v163 = vsel %vm162, %v103, %v161
      %vm164 = vcmp.eq.f32.partialorder %v103, 0.0
      %v165 = vand.u32 %v103, 2147483648
      %v166 = vsel %vm164, %v165, %v163
      %v167 = vrsqrt.pop %v104
      %v168 = vmul.f32 %v167, %v104
      %v169 = vmul.f32 %v168, %v167
      %v170 = vmul.f32 0.5, %v169
      %v171 = vsub.f32 1.5, %v170
      %v172 = vmul.f32 %v167, %v171
      %v173 = vmul.f32 %v104, %v172
      %vm174 = vcmp.eq.f32.partialorder %v104, inf
      %v175 = vsel %vm174, %v104, %v173
      %vm176 = vcmp.eq.f32.partialorder %v104, 0.0
      %v177 = vand.u32 %v104, 2147483648
      %v178 = vsel %vm176, %v177, %v175
      %v179 = vrsqrt.pop %v105
      %v180 = vmul.f32 %v179, %v105
      %v181 = vmul.f32 %v180, %v179
      %v182 = vmul.f32 0.5, %v181
      %v183 = vsub.f32 1.5, %v182
      %v184 = vmul.f32 %v179, %v183
      %v185 = vmul.f32 %v105, %v184
      %vm186 = vcmp.eq.f32.partialorder %v105, inf
      %v187 = vsel %vm186, %v105, %v185
      %vm188 = vcmp.eq.f32.partialorder %v105, 0.0
      %v189 = vand.u32 %v105, 2147483648
      %v190 = vsel %vm188, %v189, %v187
      %v191 = vrsqrt.pop %v106
      %v192 = vmul.f32 %v191, %v106
      %v193 = vmul.f32 %v192, %v191
      %v194 = vmul.f32 0.5, %v193
      %v195 = vsub.f32 1.5, %v194
      %v196 = vmul.f32 %v191, %v195
      %v197 = vmul.f32 %v106, %v196
      %vm198 = vcmp.eq.f32.partialorder %v106, inf
      %v199 = vsel %vm198, %v106, %v197
      %vm200 = vcmp.eq.f32.partialorder %v106, 0.0
      %v201 = vand.u32 %v106, 2147483648
      %v202 = vsel %vm200, %v201, %v199
      %v203 = vmul.f32 %v30, 56.165283
      %v204 = vmul.f32 %v31, 56.165283
      %v205 = vmul.f32 %v32, 56.165283
      %v206 = vmul.f32 %v33, 56.165283
      %v207 = vmul.f32 %v34, 56.165283
      %v208 = vmul.f32 %v35, 56.165283
      %v209 = vmul.f32 %v36, 56.165283
      %v210 = vmul.f32 %v37, 56.165283
      %v211 = vmul.f32 %v118, 30.683235
      %v212 = vmul.f32 %v130, 30.683235
      %v213 = vmul.f32 %v142, 30.683235
      %v214 = vmul.f32 %v154, 30.683235
      %v215 = vmul.f32 %v166, 30.683235
      %v216 = vmul.f32 %v178, 30.683235
      %v217 = vmul.f32 %v190, 30.683235
      %v218 = vmul.f32 %v202, 30.683235
      %v219 = vsub.f32 %v203, %v211
      %v220 = vsub.f32 %v204, %v212
      %v221 = vsub.f32 %v205, %v213
      %v222 = vsub.f32 %v206, %v214
      %v223 = vsub.f32 %v207, %v215
      %v224 = vsub.f32 %v208, %v216
      %v225 = vsub.f32 %v209, %v217
      %v226 = vsub.f32 %v210, %v218
      %v227 = vmul.f32 %v30, 64.0
      %v228 = vmul.f32 %v31, 64.0
      %v229 = vmul.f32 %v32, 64.0
      %v230 = vmul.f32 %v33, 64.0
      %v231 = vmul.f32 %v34, 64.0
      %v232 = vmul.f32 %v35, 64.0
      %v233 = vmul.f32 %v36, 64.0
      %v234 = vmul.f32 %v37, 64.0
      %v235 = vsel %vm83, %v219, %v227
      %v236 = vsel %vm84, %v220, %v228
      %v237 = vsel %vm85, %v221, %v229
      %v238 = vsel %vm86, %v222, %v230
      %v239 = vsel %vm87, %v223, %v231
      %v240 = vsel %vm88, %v224, %v232
      %v241 = vsel %vm89, %v225, %v233
      %v242 = vsel %vm90, %v226, %v234
      %243 = vst [vmem:[#allocation7] sm:$0xff] %v235
      %244 = vst [vmem:[#allocation7 + $0x8] sm:$0xff] %v236
      %245 = vst [vmem:[#allocation7 + $0x10] sm:$0xff] %v237
      %246 = vst [vmem:[#allocation7 + $0x18] sm:$0xff] %v238
      %247 = vst [vmem:[#allocation7 + $0x20] sm:$0xff] %v239
      %248 = vst [vmem:[#allocation7 + $0x28] sm:$0xff] %v240
      %249 = vst [vmem:[#allocation7 + $0x30] sm:$0xff] %v241
      %250 = vst [vmem:[#allocation7 + $0x38] sm:$0xff] %v242
    $region21: #{tpu_custom_call.1} parent=1 // pred_fallthru
      _
    // Predicated region
    $region22: #{tpu_custom_call.1} parent=1 // pred_check
      _
    $region23: #{tpu_custom_call.1} parent=1 // pred_check_branch
      %252 = sbr.rel (0) target = $region25
    $region24: #{tpu_custom_call.1} parent=1 // pred_region
      %254 = vsyncadd [#allocation6], 0
      %s255 = sshll.u32 [#allocation7], 4
      %s256 = int_to_ptr.vmem [resolvable:$true] %s255
      %s257 = sshll.u32 %s3, 4
      %s258 = int_to_ptr.hbm [resolvable:$true] %s257
      %263 = dma.vmem_to_hbm [thread:$0]  %s256, 1024, %s258, [#allocation6], 512, 512, 32
    $region25: #{tpu_custom_call.1} parent=1 // pred_fallthru
      _
    // Predicated region
    $region26: #{tpu_custom_call.1} parent=1 // pred_check
      _
    $region27: #{tpu_custom_call.1} parent=1 // pred_check_branch
      %265 = sbr.rel (0) target = $region29
    $region28: #{tpu_custom_call.1} parent=1 // pred_region
      %267 = dma.done [#allocation6], 1024
    $region29: #{tpu_custom_call.1} parent=1 // pred_fallthru
      _
    %268 = vsyncpa [#allocation5], 1
    %269 = vsyncpa [#allocation6], 1

</llo_original>
